<compile_context>
chip_gen: v7x
topology: tpu7x:2x2x1
jax: 0.10.0
libtpu: 0.0.40
codegen_flags: <defaults>
</compile_context>

<pallas_src>
import math

import jax
import jax.numpy as jnp
from jax.experimental import pallas as pl
from jax.experimental.pallas import tpu as pltpu

# Small BERT-like config (bert-base scaled down): hidden=32, heads=4, head_dim=8.
B, S, D = 2, 4, 32
NUM_HEADS, HEAD_DIM = 4, 8
BS = B * S
assert NUM_HEADS * HEAD_DIM == D


def self_attention_kernel(x_ref, w_ref, side_ref, out_ref):
    """Single invocation: fused (bias-folded) QKV projection + block-masked MHA for all batches."""
    x = x_ref[...]                                               # (BS, D+1)  x with ones column
    # Fused QKV projection with bias folded into the weight (K = D+1).
    qkv = jnp.dot(x, w_ref[...], preferred_element_type=jnp.float32)   # (BS, 3D)

    gmask = side_ref[0:BS, :]                                    # (BS, D)   pre-tiled gabriel mask
    bias = side_ref[BS:2 * BS, 0:BS]                             # (BS, BS)  attn mask + cross-batch -1e9
    scale = 1.0 / math.sqrt(HEAD_DIM)

    head_ctx = []
    for h in range(NUM_HEADS):                                   # static unroll, heads independent
        lo = h * HEAD_DIM
        qh = qkv[:, lo:lo + HEAD_DIM]                            # (BS, hd)
        kh = qkv[:, D + lo:D + lo + HEAD_DIM]                    # (BS, hd)
        vh = qkv[:, 2 * D + lo:2 * D + lo + HEAD_DIM]            # (BS, hd)

        # Contract on the last dim of both operands — no explicit kh.T / XLU transpose.
        scores = jax.lax.dot_general(
            qh, kh, (((1,), (1,)), ((), ())),
            preferred_element_type=jnp.float32) * scale          # (BS, BS)
        scores = scores + bias                                   # + attention_mask / block off cross-batch

        m = jnp.max(scores, axis=-1, keepdims=True)
        e = jnp.exp(scores - m)                                  # cross-batch entries underflow to 0
        s = jnp.sum(e, axis=-1, keepdims=True)
        r = pl.reciprocal(s, approx=True)                        # EUP slot
        r = r * (2.0 - s * r)                                    # one Newton step -> ~f32 accuracy
        probs = e * r
        # attention_probs dropout + gabriel_dropout: identity in eval mode

        head_ctx.append(jnp.dot(probs, vh,
                                preferred_element_type=jnp.float32))   # (BS, hd)

    # Hoisted gabriel_mask add + single full-width store.
    out_ref[...] = jnp.concatenate(head_ctx, axis=-1) + gmask    # (BS, D)


def custom_self_attention(x, wq, bq, wk, bk, wv, bv, attention_mask, gabriel_mask):
    # Wrapper-side prep (free XLA work, done once): flatten batch, fold bias into the fused
    # QKV weight, build the batch-block bias, pre-tile the gabriel mask, pack side constants.
    x_flat = x.reshape(BS, D)
    x_aug = jnp.concatenate([x_flat, jnp.ones((BS, 1), dtype=x_flat.dtype)], axis=1)  # (BS, D+1)

    w_qkv = jnp.concatenate([wq, wk, wv], axis=1)                # (D, 3D)
    b_qkv = jnp.concatenate([bq, bk, bv], axis=1)                # (1, 3D)
    w_aug = jnp.concatenate([w_qkv, b_qkv], axis=0)              # (D+1, 3D)

    # Block bias: same-batch -> + attention_mask[key], cross-batch -> -1e9 (masks attention).
    batch_ids = jnp.arange(BS) // S
    same = batch_ids[:, None] == batch_ids[None, :]
    amask_per_key = jnp.tile(attention_mask[0].astype(jnp.float32), (B,))     # (BS,)
    block_bias = jnp.where(same, amask_per_key[None, :], jnp.float32(-1e9))   # (BS, BS)

    gmask_tiled = jnp.tile(gabriel_mask.reshape(S, D), (B, 1))   # (BS, D)

    # One side-constant slab (one DMA): rows [0:BS) = gmask, rows [BS:2BS) lanes [0:BS) = bias.
    side = jnp.zeros((2 * BS, D), dtype=jnp.float32)
    side = side.at[0:BS, :].set(gmask_tiled)
    side = side.at[BS:2 * BS, 0:BS].set(block_bias)

    out_flat = pl.pallas_call(
        self_attention_kernel,
        out_shape=jax.ShapeDtypeStruct((BS, D), jnp.float32),
        in_specs=[pl.BlockSpec(memory_space=pltpu.MemorySpace.VMEM)] * 3,
        out_specs=pl.BlockSpec(memory_space=pltpu.MemorySpace.VMEM),
    )(x_aug, w_aug, side)
    return out_flat.reshape(B, S, D)


def reference(x, wq, bq, wk, bk, wv, bv, amask, gmask):
    """Pure-JAX reference of the same forward semantics (per-batch attention)."""
    q = x @ wq + bq[0]
    k = x @ wk + bk[0]
    v = x @ wv + bv[0]

    def split(t):
        return t.reshape(B, S, NUM_HEADS, HEAD_DIM).transpose(0, 2, 1, 3)

    qh, kh, vh = split(q), split(k), split(v)
    scores = jnp.einsum("bhqd,bhkd->bhqk", qh, kh) / math.sqrt(HEAD_DIM)
    scores = scores + amask[:, None, None, :]
    probs = jax.nn.softmax(scores, axis=-1)
    ctx = jnp.einsum("bhqk,bhkd->bhqd", probs, vh)
    ctx = ctx.transpose(0, 2, 1, 3).reshape(B, S, D)
    return ctx + gmask


if __name__ == "__main__":
    key = jax.random.PRNGKey(0)
    kx, kq, kk, kv, kbq, kbk, kbv = jax.random.split(key, 7)

    hidden_states = jax.random.normal(kx, (B, S, D), dtype=jnp.float32)
    wq = 0.02 * jax.random.normal(kq, (D, D), dtype=jnp.float32)
    wk = 0.02 * jax.random.normal(kk, (D, D), dtype=jnp.float32)
    wv = 0.02 * jax.random.normal(kv, (D, D), dtype=jnp.float32)
    bq = 0.02 * jax.random.normal(kbq, (1, D), dtype=jnp.float32)
    bk = 0.02 * jax.random.normal(kbk, (1, D), dtype=jnp.float32)
    bv = 0.02 * jax.random.normal(kbv, (1, D), dtype=jnp.float32)

    # attention_mask = [[1, 1, 1, 1]]  (added raw to the scores, as the module does)
    attention_mask = jnp.ones((1, S), dtype=jnp.float32)
    # gabriel_mask: zeros with a single 1.0 at [0, 1, 1]
    gabriel_mask = jnp.zeros((1, S, D), dtype=jnp.float32).at[0, 1, 1].set(1.0)

    out = custom_self_attention(hidden_states, wq, bq, wk, bk, wv, bv,
                                attention_mask, gabriel_mask)
    out = jax.block_until_ready(out)

    ref = reference(hidden_states, wq, bq, wk, bk, wv, bv, attention_mask, gabriel_mask)
    assert out.shape == (B, S, D)
    assert jnp.allclose(out, ref, atol=1e-5, rtol=1e-5), "mismatch vs reference"

    print("KERNEL_OK")
</pallas_src>

<mosaic_0001>
module attributes {stable_mosaic.version = 11 : i64} {
  func.func @self_attention_kernel(%arg0: memref<8x33xf32, #tpu.memory_space<vmem>>, %arg1: memref<33x96xf32, #tpu.memory_space<vmem>>, %arg2: memref<16x32xf32, #tpu.memory_space<vmem>>, %arg3: memref<8x32xf32, #tpu.memory_space<vmem>>) attributes {dimension_semantics = [], scalar_prefetch = 0 : i64, scratch_operands = 0 : i64, tpu.core_type = #tpu.core_type<tc>} {
    %c0 = arith.constant 0 : index
    %c0_0 = arith.constant 0 : index
    %0 = vector.load %arg0[%c0, %c0_0] : memref<8x33xf32, #tpu.memory_space<vmem>>, vector<8x33xf32>
    %c0_1 = arith.constant 0 : index
    %c0_2 = arith.constant 0 : index
    %1 = vector.load %arg1[%c0_1, %c0_2] : memref<33x96xf32, #tpu.memory_space<vmem>>, vector<33x96xf32>
    %cst = arith.constant dense<0.000000e+00> : vector<8x96xf32>
    %2 = tpu.matmul %0, %1, %cst {dimension_numbers = #tpu.dot_dimension_numbers<[1], [0], [0], [1], [0, 0, 1, 1], [], []>} : vector<8x33xf32>, vector<33x96xf32>, vector<8x96xf32> -> vector<8x96xf32>
    %c0_3 = arith.constant 0 : index
    %c0_4 = arith.constant 0 : index
    %3 = vector.load %arg2[%c0_3, %c0_4] : memref<16x32xf32, #tpu.memory_space<vmem>>, vector<8x32xf32>
    %c8 = arith.constant 8 : index
    %c0_5 = arith.constant 0 : index
    %4 = vector.load %arg2[%c8, %c0_5] : memref<16x32xf32, #tpu.memory_space<vmem>>, vector<8x8xf32>
    %5 = vector.extract_strided_slice %2 {offsets = [0, 0], sizes = [8, 8], strides = [1, 1]} : vector<8x96xf32> to vector<8x8xf32>
    %6 = vector.extract_strided_slice %2 {offsets = [0, 32], sizes = [8, 8], strides = [1, 1]} : vector<8x96xf32> to vector<8x8xf32>
    %7 = vector.extract_strided_slice %2 {offsets = [0, 64], sizes = [8, 8], strides = [1, 1]} : vector<8x96xf32> to vector<8x8xf32>
    %cst_6 = arith.constant dense<0.000000e+00> : vector<8x8xf32>
    %8 = tpu.matmul %5, %6, %cst_6 {dimension_numbers = #tpu.dot_dimension_numbers<[1], [1], [0], [0], [0, 0, 1, 0], [], []>} : vector<8x8xf32>, vector<8x8xf32>, vector<8x8xf32> -> vector<8x8xf32>
    %cst_7 = arith.constant 0.353553385 : f32
    %9 = vector.broadcast %cst_7 : f32 to vector<8x8xf32>
    %10 = arith.mulf %8, %9 : vector<8x8xf32>
    %11 = arith.addf %10, %4 : vector<8x8xf32>
    %cst_8 = arith.constant dense<0xFF800000> : vector<8xf32>
    %12 = vector.multi_reduction <maximumf>, %11, %cst_8 [1] : vector<8x8xf32> to vector<8xf32>
    %13 = vector.shape_cast %12 : vector<8xf32> to vector<8x1xf32>
    %14 = vector.broadcast %13 : vector<8x1xf32> to vector<8x8xf32>
    %15 = arith.subf %11, %14 : vector<8x8xf32>
    %16 = math.exp %15 : vector<8x8xf32>
    %cst_9 = arith.constant dense<0.000000e+00> : vector<8xf32>
    %17 = vector.multi_reduction <add>, %16, %cst_9 [1] : vector<8x8xf32> to vector<8xf32>
    %18 = vector.shape_cast %17 : vector<8xf32> to vector<8x1xf32>
    %19 = tpu.reciprocal %18 {approx = true} : vector<8x1xf32> -> vector<8x1xf32>
    %20 = arith.mulf %18, %19 : vector<8x1xf32>
    %cst_10 = arith.constant 2.000000e+00 : f32
    %21 = vector.broadcast %cst_10 : f32 to vector<8x1xf32>
    %22 = arith.subf %21, %20 : vector<8x1xf32>
    %23 = arith.mulf %19, %22 : vector<8x1xf32>
    %24 = vector.broadcast %23 : vector<8x1xf32> to vector<8x8xf32>
    %25 = arith.mulf %16, %24 : vector<8x8xf32>
    %cst_11 = arith.constant dense<0.000000e+00> : vector<8x8xf32>
    %26 = tpu.matmul %25, %7, %cst_11 {dimension_numbers = #tpu.dot_dimension_numbers<[1], [0], [0], [1], [0, 0, 1, 1], [], []>} : vector<8x8xf32>, vector<8x8xf32>, vector<8x8xf32> -> vector<8x8xf32>
    %27 = vector.extract_strided_slice %2 {offsets = [0, 8], sizes = [8, 8], strides = [1, 1]} : vector<8x96xf32> to vector<8x8xf32>
    %28 = vector.extract_strided_slice %2 {offsets = [0, 40], sizes = [8, 8], strides = [1, 1]} : vector<8x96xf32> to vector<8x8xf32>
    %29 = vector.extract_strided_slice %2 {offsets = [0, 72], sizes = [8, 8], strides = [1, 1]} : vector<8x96xf32> to vector<8x8xf32>
    %cst_12 = arith.constant dense<0.000000e+00> : vector<8x8xf32>
    %30 = tpu.matmul %27, %28, %cst_12 {dimension_numbers = #tpu.dot_dimension_numbers<[1], [1], [0], [0], [0, 0, 1, 0], [], []>} : vector<8x8xf32>, vector<8x8xf32>, vector<8x8xf32> -> vector<8x8xf32>
    %cst_13 = arith.constant 0.353553385 : f32
    %31 = vector.broadcast %cst_13 : f32 to vector<8x8xf32>
    %32 = arith.mulf %30, %31 : vector<8x8xf32>
    %33 = arith.addf %32, %4 : vector<8x8xf32>
    %cst_14 = arith.constant dense<0xFF800000> : vector<8xf32>
    %34 = vector.multi_reduction <maximumf>, %33, %cst_14 [1] : vector<8x8xf32> to vector<8xf32>
    %35 = vector.shape_cast %34 : vector<8xf32> to vector<8x1xf32>
    %36 = vector.broadcast %35 : vector<8x1xf32> to vector<8x8xf32>
    %37 = arith.subf %33, %36 : vector<8x8xf32>
    %38 = math.exp %37 : vector<8x8xf32>
    %cst_15 = arith.constant dense<0.000000e+00> : vector<8xf32>
    %39 = vector.multi_reduction <add>, %38, %cst_15 [1] : vector<8x8xf32> to vector<8xf32>
    %40 = vector.shape_cast %39 : vector<8xf32> to vector<8x1xf32>
    %41 = tpu.reciprocal %40 {approx = true} : vector<8x1xf32> -> vector<8x1xf32>
    %42 = arith.mulf %40, %41 : vector<8x1xf32>
    %cst_16 = arith.constant 2.000000e+00 : f32
    %43 = vector.broadcast %cst_16 : f32 to vector<8x1xf32>
    %44 = arith.subf %43, %42 : vector<8x1xf32>
    %45 = arith.mulf %41, %44 : vector<8x1xf32>
    %46 = vector.broadcast %45 : vector<8x1xf32> to vector<8x8xf32>
    %47 = arith.mulf %38, %46 : vector<8x8xf32>
    %cst_17 = arith.constant dense<0.000000e+00> : vector<8x8xf32>
    %48 = tpu.matmul %47, %29, %cst_17 {dimension_numbers = #tpu.dot_dimension_numbers<[1], [0], [0], [1], [0, 0, 1, 1], [], []>} : vector<8x8xf32>, vector<8x8xf32>, vector<8x8xf32> -> vector<8x8xf32>
    %49 = vector.extract_strided_slice %2 {offsets = [0, 16], sizes = [8, 8], strides = [1, 1]} : vector<8x96xf32> to vector<8x8xf32>
    %50 = vector.extract_strided_slice %2 {offsets = [0, 48], sizes = [8, 8], strides = [1, 1]} : vector<8x96xf32> to vector<8x8xf32>
    %51 = vector.extract_strided_slice %2 {offsets = [0, 80], sizes = [8, 8], strides = [1, 1]} : vector<8x96xf32> to vector<8x8xf32>
    %cst_18 = arith.constant dense<0.000000e+00> : vector<8x8xf32>
    %52 = tpu.matmul %49, %50, %cst_18 {dimension_numbers = #tpu.dot_dimension_numbers<[1], [1], [0], [0], [0, 0, 1, 0], [], []>} : vector<8x8xf32>, vector<8x8xf32>, vector<8x8xf32> -> vector<8x8xf32>
    %cst_19 = arith.constant 0.353553385 : f32
    %53 = vector.broadcast %cst_19 : f32 to vector<8x8xf32>
    %54 = arith.mulf %52, %53 : vector<8x8xf32>
    %55 = arith.addf %54, %4 : vector<8x8xf32>
    %cst_20 = arith.constant dense<0xFF800000> : vector<8xf32>
    %56 = vector.multi_reduction <maximumf>, %55, %cst_20 [1] : vector<8x8xf32> to vector<8xf32>
    %57 = vector.shape_cast %56 : vector<8xf32> to vector<8x1xf32>
    %58 = vector.broadcast %57 : vector<8x1xf32> to vector<8x8xf32>
    %59 = arith.subf %55, %58 : vector<8x8xf32>
    %60 = math.exp %59 : vector<8x8xf32>
    %cst_21 = arith.constant dense<0.000000e+00> : vector<8xf32>
    %61 = vector.multi_reduction <add>, %60, %cst_21 [1] : vector<8x8xf32> to vector<8xf32>
    %62 = vector.shape_cast %61 : vector<8xf32> to vector<8x1xf32>
    %63 = tpu.reciprocal %62 {approx = true} : vector<8x1xf32> -> vector<8x1xf32>
    %64 = arith.mulf %62, %63 : vector<8x1xf32>
    %cst_22 = arith.constant 2.000000e+00 : f32
    %65 = vector.broadcast %cst_22 : f32 to vector<8x1xf32>
    %66 = arith.subf %65, %64 : vector<8x1xf32>
    %67 = arith.mulf %63, %66 : vector<8x1xf32>
    %68 = vector.broadcast %67 : vector<8x1xf32> to vector<8x8xf32>
    %69 = arith.mulf %60, %68 : vector<8x8xf32>
    %cst_23 = arith.constant dense<0.000000e+00> : vector<8x8xf32>
    %70 = tpu.matmul %69, %51, %cst_23 {dimension_numbers = #tpu.dot_dimension_numbers<[1], [0], [0], [1], [0, 0, 1, 1], [], []>} : vector<8x8xf32>, vector<8x8xf32>, vector<8x8xf32> -> vector<8x8xf32>
    %71 = vector.extract_strided_slice %2 {offsets = [0, 24], sizes = [8, 8], strides = [1, 1]} : vector<8x96xf32> to vector<8x8xf32>
    %72 = vector.extract_strided_slice %2 {offsets = [0, 56], sizes = [8, 8], strides = [1, 1]} : vector<8x96xf32> to vector<8x8xf32>
    %73 = vector.extract_strided_slice %2 {offsets = [0, 88], sizes = [8, 8], strides = [1, 1]} : vector<8x96xf32> to vector<8x8xf32>
    %cst_24 = arith.constant dense<0.000000e+00> : vector<8x8xf32>
    %74 = tpu.matmul %71, %72, %cst_24 {dimension_numbers = #tpu.dot_dimension_numbers<[1], [1], [0], [0], [0, 0, 1, 0], [], []>} : vector<8x8xf32>, vector<8x8xf32>, vector<8x8xf32> -> vector<8x8xf32>
    %cst_25 = arith.constant 0.353553385 : f32
    %75 = vector.broadcast %cst_25 : f32 to vector<8x8xf32>
    %76 = arith.mulf %74, %75 : vector<8x8xf32>
    %77 = arith.addf %76, %4 : vector<8x8xf32>
    %cst_26 = arith.constant dense<0xFF800000> : vector<8xf32>
    %78 = vector.multi_reduction <maximumf>, %77, %cst_26 [1] : vector<8x8xf32> to vector<8xf32>
    %79 = vector.shape_cast %78 : vector<8xf32> to vector<8x1xf32>
    %80 = vector.broadcast %79 : vector<8x1xf32> to vector<8x8xf32>
    %81 = arith.subf %77, %80 : vector<8x8xf32>
    %82 = math.exp %81 : vector<8x8xf32>
    %cst_27 = arith.constant dense<0.000000e+00> : vector<8xf32>
    %83 = vector.multi_reduction <add>, %82, %cst_27 [1] : vector<8x8xf32> to vector<8xf32>
    %84 = vector.shape_cast %83 : vector<8xf32> to vector<8x1xf32>
    %85 = tpu.reciprocal %84 {approx = true} : vector<8x1xf32> -> vector<8x1xf32>
    %86 = arith.mulf %84, %85 : vector<8x1xf32>
    %cst_28 = arith.constant 2.000000e+00 : f32
    %87 = vector.broadcast %cst_28 : f32 to vector<8x1xf32>
    %88 = arith.subf %87, %86 : vector<8x1xf32>
    %89 = arith.mulf %85, %88 : vector<8x1xf32>
    %90 = vector.broadcast %89 : vector<8x1xf32> to vector<8x8xf32>
    %91 = arith.mulf %82, %90 : vector<8x8xf32>
    %cst_29 = arith.constant dense<0.000000e+00> : vector<8x8xf32>
    %92 = tpu.matmul %91, %73, %cst_29 {dimension_numbers = #tpu.dot_dimension_numbers<[1], [0], [0], [1], [0, 0, 1, 1], [], []>} : vector<8x8xf32>, vector<8x8xf32>, vector<8x8xf32> -> vector<8x8xf32>
    %93 = tpu.concatenate %26, %48, %70, %92 in 1 : vector<8x8xf32>, vector<8x8xf32>, vector<8x8xf32>, vector<8x8xf32> -> vector<8x32xf32>
    %94 = arith.addf %93, %3 : vector<8x32xf32>
    %c0_30 = arith.constant 0 : index
    %c0_31 = arith.constant 0 : index
    %95 = vector.load %arg3[%c0_30, %c0_31] : memref<8x32xf32, #tpu.memory_space<vmem>>, vector<8x32xf32>
    tpu.vector_store %arg3[%c0_30, %c0_31], %94 {strides = array<i32>} : memref<8x32xf32, #tpu.memory_space<vmem>>, vector<8x32xf32>,
    return
  }
}

</mosaic_0001>

<llo_original>
// kernel: tpu_custom_call.1
$region0: #{tpu_custom_call.1}
  #allocation0 [shape = 'u32[]', space=smem, size = 0x4, offset = 0x4, fixed_abs, tag = 'smem constant byte address 0x4 - core index']
  #allocation1 [shape = 'u32[144,128]{1,0:T(1,128)}', space=vmem, size = 0x12000, scoped, tag = 'internal scratch']
  %s0 = inlined_call_operand.hbm [shape: f32[8,33], index: 0, kind: input, shape index: {}]
  %s1 = inlined_call_operand.hbm [shape: f32[33,96], index: 1, kind: input, shape index: {}]
  %s2 = inlined_call_operand.hbm [shape: f32[16,32], index: 2, kind: input, shape index: {}]
  %s3 = inlined_call_operand.hbm [shape: f32[8,32], index: 3, kind: output, shape index: {}]
  %s4 = sld [smem:[#allocation0]]
  $region34: #{tpu_custom_call.1} parent=0
    _
  %s6 = ssub.s32 1, %s4
  %s7 = scalar_select 0, %s6, %s4
  $region1: #{tpu_custom_call.1} parent=0
    #allocation2 [shape = 'u8[4096]{0}', space=vmem, size = 0x1000, scoped, tag = 'input window, operand 0, single buffered']
    #allocation3 [shape = 's32[1]{0}', space=sflag, size = 0x4, scoped, tag = 'scoped memory for tpu_custom_call.1']
    #allocation4 [shape = 's32[1]{0}', space=sflag, size = 0x4, scoped, tag = 'scoped memory for tpu_custom_call.1']
    #allocation5 [shape = 'u8[20480]{0}', space=vmem, size = 0x5000, scoped, tag = 'input window, operand 1, single buffered']
    #allocation6 [shape = 's32[1]{0}', space=sflag, size = 0x4, scoped, tag = 'scoped memory for tpu_custom_call.1']
    #allocation7 [shape = 'u8[8192]{0}', space=vmem, size = 0x2000, scoped, tag = 'input window, operand 2, single buffered']
    #allocation8 [shape = 'u8[4096]{0}', space=vmem, size = 0x1000, scoped, tag = 'output window, operand 0, single buffered']
    %8 = vsyncpa [#allocation3], 0
    %9 = vsyncpa [#allocation6], 0
    %10 = vsyncpa [#allocation4], 0
    // Predicated region
    $region2: #{tpu_custom_call.1} parent=1 // pred_check
      _
    $region3: #{tpu_custom_call.1} parent=1 // pred_check_branch
      %12 = sbr.rel (0) target = $region5
    $region4: #{tpu_custom_call.1} parent=1 // pred_region
      %s14 = ssub.s32 128, 128
      %15 = vsyncadd [#allocation3], %s14
      %s17 = sshll.u32 [#allocation2], 4
      %s18 = int_to_ptr.vmem [resolvable:$true] %s17
      %20 = dma.hbm_to_vmem [thread:$0]  %s0, 128, %s18, [#allocation3]
    $region5: #{tpu_custom_call.1} parent=1 // pred_fallthru
      _
    // Predicated region
    $region6: #{tpu_custom_call.1} parent=1 // pred_check
      _
    $region7: #{tpu_custom_call.1} parent=1 // pred_check_branch
      %22 = sbr.rel (0) target = $region9
    $region8: #{tpu_custom_call.1} parent=1 // pred_region
      %s24 = ssub.s32 640, 640
      %25 = vsyncadd [#allocation6], %s24
      %s26 = sshll.u32 [#allocation5], 4
      %s27 = int_to_ptr.vmem [resolvable:$true] %s26
      %32 = dma.hbm_to_vmem [thread:$0]  %s1, 640, %s27, [#allocation6], 128, 128, 8
    $region9: #{tpu_custom_call.1} parent=1 // pred_fallthru
      _
    // Predicated region
    $region10: #{tpu_custom_call.1} parent=1 // pred_check
      _
    $region11: #{tpu_custom_call.1} parent=1 // pred_check_branch
      %34 = sbr.rel (0) target = $region13
    $region12: #{tpu_custom_call.1} parent=1 // pred_region
      %s36 = ssub.s32 256, 256
      %37 = vsyncadd [#allocation6], %s36
      %s38 = sshll.u32 [#allocation7], 4
      %s39 = int_to_ptr.vmem [resolvable:$true] %s38
      %44 = dma.hbm_to_vmem [thread:$0]  %s2, 256, %s39, [#allocation6], 128, 128, 8
    $region13: #{tpu_custom_call.1} parent=1 // pred_fallthru
      _
    // Predicated region
    $region14: #{tpu_custom_call.1} parent=1 // pred_check
      _
    $region15: #{tpu_custom_call.1} parent=1 // pred_check_branch
      %46 = sbr.rel (0) target = $region17
    $region16: #{tpu_custom_call.1} parent=1 // pred_region
      %47 = dma.done [#allocation3], 128
    $region17: #{tpu_custom_call.1} parent=1 // pred_fallthru
      _
    // Predicated region
    $region18: #{tpu_custom_call.1} parent=1 // pred_check
      _
    $region19: #{tpu_custom_call.1} parent=1 // pred_check_branch
      %49 = sbr.rel (0) target = $region21
    $region20: #{tpu_custom_call.1} parent=1 // pred_region
      %50 = dma.done [#allocation6], 640
    $region21: #{tpu_custom_call.1} parent=1 // pred_fallthru
      _
    // Predicated region
    $region22: #{tpu_custom_call.1} parent=1 // pred_check
      _
    $region23: #{tpu_custom_call.1} parent=1 // pred_check_branch
      %52 = sbr.rel (0) target = $region25
    $region24: #{tpu_custom_call.1} parent=1 // pred_region
      %53 = dma.done [#allocation6], 256
    $region25: #{tpu_custom_call.1} parent=1 // pred_fallthru
      _
    %v54 = vld [vmem:[#allocation2] sm:$0xff]
    %v55 = vld [vmem:[#allocation5] sm:$0xff]
    %v56 = vld [vmem:[#allocation5 + $0x8] sm:$0xff]
    %v57 = vld [vmem:[#allocation5 + $0x10] sm:$0xff]
    %v58 = vld [vmem:[#allocation5 + $0x18] sm:$0xff]
    %v59 = vld [vmem:[#allocation5 + $0x20] sm:$0x1]
    %vm60 = vcmask 269312
    %v62 = vsel %vm60, %v54, 0
    %vm64 = vcmask 1040384
    %v66 = vsel %vm64, %v59, 0
    %68 = vmatprep.subr.mxu0 0.0
    %69 = vmatpush1.msra.mxu0 %v55
    %70 = vmatprep.subr.mxu0 0.0
    %71 = vmatpush1.msra.mxu0 %v56
    %72 = vmatprep.subr.mxu0 0.0
    %73 = vmatpush1.msra.mxu0 %v57
    %74 = vmatprep.subr.mxu0 0.0
    %75 = vmatpush1.msra.mxu0 %v58
    %76 = vmatprep.subr.mxu0 0.0
    %77 = vmatpush1.msra.mxu0 %v66
    %78 = vmatprep.subr.mxu0 0.0
    %79 = vmatpush1.msra.mxu0 0.0
    %80 = vmatprep.subr.mxu0 0.0
    %81 = vmatpush1.msra.mxu0 0.0
    %82 = vmatprep.subr.mxu0 0.0
    %83 = vmatpush1.msra.mxu0 0.0
    %84 = vmatprep.subr.mxu0 0.0
    %85 = vmatpush1.msra.mxu0 0.0
    %86 = vmatprep.subr.mxu0 0.0
    %87 = vmatpush1.msra.mxu0 0.0
    %88 = vmatprep.subr.mxu0 0.0
    %89 = vmatpush1.msra.mxu0 0.0
    %90 = vmatprep.subr.mxu0 0.0
    %91 = vmatpush1.msra.mxu0 0.0
    %92 = vmatprep.subr.mxu0 0.0
    %93 = vmatpush1.msra.mxu0 0.0
    %94 = vmatprep.subr.mxu0 0.0
    %95 = vmatpush1.msra.mxu0 0.0
    %96 = vmatprep.subr.mxu0 0.0
    %97 = vmatpush1.msra.mxu0 0.0
    %98 = vmatprep.subr.mxu0 0.0
    %99 = vmatpush1.msra.mxu0 0.0
    %100 = vmatprep.subr.mxu0 0.0
    %101 = vmatpush1.msra.mxu0 0.0
    %102 = vmatprep.subr.mxu0 0.0
    %103 = vmatpush1.msra.mxu0 0.0
    %104 = vmatprep.subr.mxu0 0.0
    %105 = vmatpush1.msra.mxu0 0.0
    %106 = vmatprep.subr.mxu0 0.0
    %107 = vmatpush1.msra.mxu0 0.0
    %108 = vmatprep.subr.mxu0 0.0
    %109 = vmatpush1.msra.mxu0 0.0
    %110 = vmatprep.subr.mxu0 0.0
    %111 = vmatpush1.msra.mxu0 0.0
    %112 = vmatprep.subr.mxu0 0.0
    %113 = vmatpush1.msra.mxu0 0.0
    %114 = vmatprep.subr.mxu0 0.0
    %115 = vmatpush1.msra.mxu0 0.0
    %116 = vmatprep.subr.mxu0 0.0
    %117 = vmatpush1.msra.mxu0 0.0
    %118 = vmatprep.subr.mxu0 0.0
    %119 = vmatpush1.msra.mxu0 0.0
    %120 = vmatprep.subr.mxu0 0.0
    %121 = vmatpush1.msra.mxu0 0.0
    %122 = vmatprep.subr.mxu0 0.0
    %123 = vmatpush1.msra.mxu0 0.0
    %124 = vmatprep.subr.mxu0 0.0
    %125 = vmatpush1.msra.mxu0 0.0
    %126 = vmatprep.subr.mxu0 0.0
    %127 = vmatpush1.msra.mxu0 0.0
    %128 = vmatprep.subr.mxu0 0.0
    %129 = vmatpush1.msra.mxu0 0.0
    %130 = vmatprep.subr.mxu0 0.0
    %131 = vmatpush1.msra.mxu0 0.0
    %132 = vmatprep.mubr.f32.mxu0 0.0
    %133 = vmatmul.mubr.f32.gmra.mrb[0].mxu0 %v62
    %v134 = vpop.f32.mrb[0].mxu0
    %v135 = vadd.f32 0.0, %v134
    %v136 = vpop.f32.mrb[0].mxu0
    %137 = vdwg.mxu0
    %v138 = vld [vmem:[#allocation7] sm:$0xff]
    %v139 = vld [vmem:[#allocation7 + $0x8] sm:$0xff]
    %141 = vrot.lane.b32.xlu0 %v135, 96
    %v142 = vpop.permute.xlu0 %141
    %vm143 = vcmask 64512
    %v144 = vsel %vm143, %v135, 0
    %v146 = vsel %vm143, %v142, 0
    %148 = vmatprep.subr.mxu0 0.0
    %149 = vmatpush1.xpose.msra.mxu0 %v146
    %150 = vmatprep.subr.mxu0 0.0
    %151 = vmatpush1.xpose.msra.mxu0 0.0
    %152 = vmatprep.subr.mxu0 0.0
    %153 = vmatpush1.xpose.msra.mxu0 0.0
    %154 = vmatprep.subr.mxu0 0.0
    %155 = vmatpush1.xpose.msra.mxu0 0.0
    %156 = vmatprep.subr.mxu0 0.0
    %157 = vmatpush1.xpose.msra.mxu0 0.0
    %158 = vmatprep.subr.mxu0 0.0
    %159 = vmatpush1.xpose.msra.mxu0 0.0
    %160 = vmatprep.subr.mxu0 0.0
    %161 = vmatpush1.xpose.msra.mxu0 0.0
    %162 = vmatprep.subr.mxu0 0.0
    %163 = vmatpush1.xpose.msra.mxu0 0.0
    %164 = vmatprep.subr.mxu0 0.0
    %165 = vmatpush1.xpose.msra.mxu0 0.0
    %166 = vmatprep.subr.mxu0 0.0
    %167 = vmatpush1.xpose.msra.mxu0 0.0
    %168 = vmatprep.subr.mxu0 0.0
    %169 = vmatpush1.xpose.msra.mxu0 0.0
    %170 = vmatprep.subr.mxu0 0.0
    %171 = vmatpush1.xpose.msra.mxu0 0.0
    %172 = vmatprep.subr.mxu0 0.0
    %173 = vmatpush1.xpose.msra.mxu0 0.0
    %174 = vmatprep.subr.mxu0 0.0
    %175 = vmatpush1.xpose.msra.mxu0 0.0
    %176 = vmatprep.subr.mxu0 0.0
    %177 = vmatpush1.xpose.msra.mxu0 0.0
    %178 = vmatprep.subr.mxu0 0.0
    %179 = vmatpush1.xpose.msra.mxu0 0.0
    %180 = vmatprep.subr.mxu0 0.0
    %181 = vmatpush1.xpose.msra.mxu0 0.0
    %182 = vmatprep.subr.mxu0 0.0
    %183 = vmatpush1.xpose.msra.mxu0 0.0
    %184 = vmatprep.subr.mxu0 0.0
    %185 = vmatpush1.xpose.msra.mxu0 0.0
    %186 = vmatprep.subr.mxu0 0.0
    %187 = vmatpush1.xpose.msra.mxu0 0.0
    %188 = vmatprep.subr.mxu0 0.0
    %189 = vmatpush1.xpose.msra.mxu0 0.0
    %190 = vmatprep.subr.mxu0 0.0
    %191 = vmatpush1.xpose.msra.mxu0 0.0
    %192 = vmatprep.subr.mxu0 0.0
    %193 = vmatpush1.xpose.msra.mxu0 0.0
    %194 = vmatprep.subr.mxu0 0.0
    %195 = vmatpush1.xpose.msra.mxu0 0.0
    %196 = vmatprep.subr.mxu0 0.0
    %197 = vmatpush1.xpose.msra.mxu0 0.0
    %198 = vmatprep.subr.mxu0 0.0
    %199 = vmatpush1.xpose.msra.mxu0 0.0
    %200 = vmatprep.subr.mxu0 0.0
    %201 = vmatpush1.xpose.msra.mxu0 0.0
    %202 = vmatprep.subr.mxu0 0.0
    %203 = vmatpush1.xpose.msra.mxu0 0.0
    %204 = vmatprep.subr.mxu0 0.0
    %205 = vmatpush1.xpose.msra.mxu0 0.0
    %206 = vmatprep.subr.mxu0 0.0
    %207 = vmatpush1.xpose.msra.mxu0 0.0
    %208 = vmatprep.subr.mxu0 0.0
    %209 = vmatpush1.xpose.msra.mxu0 0.0
    %210 = vmatprep.subr.mxu0 0.0
    %211 = vmatpush1.xpose.msra.mxu0 0.0
    %212 = vmatprep.mubr.f32.mxu0 0.0
    %213 = vmatmul.mubr.f32.gmra.mrb[0].mxu0 %v144
    %v214 = vpop.f32.mrb[0].mxu0
    %v215 = vadd.f32 0.0, %v214
    %v216 = vpop.f32.mrb[0].mxu0
    %217 = vdwg.mxu0
    %v218 = vmul.f32 %v215, 0.35355338
    %v219 = vadd.f32 %v218, %v139
    %v220 = vsel %vm143, %v219, -inf
    %221 = vmax.xlane.f32.xlu0 %v220
    %v222 = vpop.xlane.xlu0 %221
    %v223 = vsub.f32 %v219, %v222
    %v224 = vmul.f32 %v223, 1.442695
    %v225 = vpow.pop %v224
    %v226 = vsel %vm143, %v225, 0.0
    %227 = vadd.xlane.f32.xlu0 %v226
    %v228 = vpop.xlane.xlu0 %227
    %v229 = vrcp.pop %v228
    %v230 = vmul.f32 %v228, %v229
    %v231 = vsub.f32 2.0, %v230
    %v232 = vmul.f32 %v229, %v231
    %v233 = vmul.f32 %v225, %v232
    %234 = vrot.lane.b32.xlu0 %v135, 64
    %v235 = vpop.permute.xlu0 %234
    %v238 = vsel %vm143, %v233, 0
    %240 = vmatprep.subr.mxu0 0.0
    %241 = vmatpush1.msra.mxu0 %v235
    %242 = vmatprep.subr.mxu0 0.0
    %243 = vmatpush1.msra.mxu0 0.0
    %244 = vmatprep.subr.mxu0 0.0
    %245 = vmatpush1.msra.mxu0 0.0
    %246 = vmatprep.subr.mxu0 0.0
    %247 = vmatpush1.msra.mxu0 0.0
    %248 = vmatprep.subr.mxu0 0.0
    %249 = vmatpush1.msra.mxu0 0.0
    %250 = vmatprep.subr.mxu0 0.0
    %251 = vmatpush1.msra.mxu0 0.0
    %252 = vmatprep.subr.mxu0 0.0
    %253 = vmatpush1.msra.mxu0 0.0
    %254 = vmatprep.subr.mxu0 0.0
    %255 = vmatpush1.msra.mxu0 0.0
    %256 = vmatprep.subr.mxu0 0.0
    %257 = vmatpush1.msra.mxu0 0.0
    %258 = vmatprep.subr.mxu0 0.0
    %259 = vmatpush1.msra.mxu0 0.0
    %260 = vmatprep.subr.mxu0 0.0
    %261 = vmatpush1.msra.mxu0 0.0
    %262 = vmatprep.subr.mxu0 0.0
    %263 = vmatpush1.msra.mxu0 0.0
    %264 = vmatprep.subr.mxu0 0.0
    %265 = vmatpush1.msra.mxu0 0.0
    %266 = vmatprep.subr.mxu0 0.0
    %267 = vmatpush1.msra.mxu0 0.0
    %268 = vmatprep.subr.mxu0 0.0
    %269 = vmatpush1.msra.mxu0 0.0
    %270 = vmatprep.subr.mxu0 0.0
    %271 = vmatpush1.msra.mxu0 0.0
    %272 = vmatprep.subr.mxu0 0.0
    %273 = vmatpush1.msra.mxu0 0.0
    %274 = vmatprep.subr.mxu0 0.0
    %275 = vmatpush1.msra.mxu0 0.0
    %276 = vmatprep.subr.mxu0 0.0
    %277 = vmatpush1.msra.mxu0 0.0
    %278 = vmatprep.subr.mxu0 0.0
    %279 = vmatpush1.msra.mxu0 0.0
    %280 = vmatprep.subr.mxu0 0.0
    %281 = vmatpush1.msra.mxu0 0.0
    %282 = vmatprep.subr.mxu0 0.0
    %283 = vmatpush1.msra.mxu0 0.0
    %284 = vmatprep.subr.mxu0 0.0
    %285 = vmatpush1.msra.mxu0 0.0
    %286 = vmatprep.subr.mxu0 0.0
    %287 = vmatpush1.msra.mxu0 0.0
    %288 = vmatprep.subr.mxu0 0.0
    %289 = vmatpush1.msra.mxu0 0.0
    %290 = vmatprep.subr.mxu0 0.0
    %291 = vmatpush1.msra.mxu0 0.0
    %292 = vmatprep.subr.mxu0 0.0
    %293 = vmatpush1.msra.mxu0 0.0
    %294 = vmatprep.subr.mxu0 0.0
    %295 = vmatpush1.msra.mxu0 0.0
    %296 = vmatprep.subr.mxu0 0.0
    %297 = vmatpush1.msra.mxu0 0.0
    %298 = vmatprep.subr.mxu0 0.0
    %299 = vmatpush1.msra.mxu0 0.0
    %300 = vmatprep.subr.mxu0 0.0
    %301 = vmatpush1.msra.mxu0 0.0
    %302 = vmatprep.subr.mxu0 0.0
    %303 = vmatpush1.msra.mxu0 0.0
    %304 = vmatprep.mubr.f32.mxu0 0.0
    %305 = vmatmul.mubr.f32.gmra.mrb[0].mxu0 %v238
    %v306 = vpop.f32.mrb[0].mxu0
    %v307 = vadd.f32 0.0, %v306
    %v308 = vpop.f32.mrb[0].mxu0
    %309 = vdwg.mxu0
    %310 = vrot.lane.b32.xlu0 %v135, 120
    %v311 = vpop.permute.xlu0 %310
    %312 = vrot.lane.b32.xlu0 %v135, 88
    %v313 = vpop.permute.xlu0 %312
    %v314 = vsel %vm143, %v311, 0
    %v316 = vsel %vm143, %v313, 0
    %318 = vmatprep.subr.mxu0 0.0
    %319 = vmatpush1.xpose.msra.mxu0 %v316
    %320 = vmatprep.subr.mxu0 0.0
    %321 = vmatpush1.xpose.msra.mxu0 0.0
    %322 = vmatprep.subr.mxu0 0.0
    %323 = vmatpush1.xpose.msra.mxu0 0.0
    %324 = vmatprep.subr.mxu0 0.0
    %325 = vmatpush1.xpose.msra.mxu0 0.0
    %326 = vmatprep.subr.mxu0 0.0
    %327 = vmatpush1.xpose.msra.mxu0 0.0
    %328 = vmatprep.subr.mxu0 0.0
    %329 = vmatpush1.xpose.msra.mxu0 0.0
    %330 = vmatprep.subr.mxu0 0.0
    %331 = vmatpush1.xpose.msra.mxu0 0.0
    %332 = vmatprep.subr.mxu0 0.0
    %333 = vmatpush1.xpose.msra.mxu0 0.0
    %334 = vmatprep.subr.mxu0 0.0
    %335 = vmatpush1.xpose.msra.mxu0 0.0
    %336 = vmatprep.subr.mxu0 0.0
    %337 = vmatpush1.xpose.msra.mxu0 0.0
    %338 = vmatprep.subr.mxu0 0.0
    %339 = vmatpush1.xpose.msra.mxu0 0.0
    %340 = vmatprep.subr.mxu0 0.0
    %341 = vmatpush1.xpose.msra.mxu0 0.0
    %342 = vmatprep.subr.mxu0 0.0
    %343 = vmatpush1.xpose.msra.mxu0 0.0
    %344 = vmatprep.subr.mxu0 0.0
    %345 = vmatpush1.xpose.msra.mxu0 0.0
    %346 = vmatprep.subr.mxu0 0.0
    %347 = vmatpush1.xpose.msra.mxu0 0.0
    %348 = vmatprep.subr.mxu0 0.0
    %349 = vmatpush1.xpose.msra.mxu0 0.0
    %350 = vmatprep.subr.mxu0 0.0
    %351 = vmatpush1.xpose.msra.mxu0 0.0
    %352 = vmatprep.subr.mxu0 0.0
    %353 = vmatpush1.xpose.msra.mxu0 0.0
    %354 = vmatprep.subr.mxu0 0.0
    %355 = vmatpush1.xpose.msra.mxu0 0.0
    %356 = vmatprep.subr.mxu0 0.0
    %357 = vmatpush1.xpose.msra.mxu0 0.0
    %358 = vmatprep.subr.mxu0 0.0
    %359 = vmatpush1.xpose.msra.mxu0 0.0
    %360 = vmatprep.subr.mxu0 0.0
    %361 = vmatpush1.xpose.msra.mxu0 0.0
    %362 = vmatprep.subr.mxu0 0.0
    %363 = vmatpush1.xpose.msra.mxu0 0.0
    %364 = vmatprep.subr.mxu0 0.0
    %365 = vmatpush1.xpose.msra.mxu0 0.0
    %366 = vmatprep.subr.mxu0 0.0
    %367 = vmatpush1.xpose.msra.mxu0 0.0
    %368 = vmatprep.subr.mxu0 0.0
    %369 = vmatpush1.xpose.msra.mxu0 0.0
    %370 = vmatprep.subr.mxu0 0.0
    %371 = vmatpush1.xpose.msra.mxu0 0.0
    %372 = vmatprep.subr.mxu0 0.0
    %373 = vmatpush1.xpose.msra.mxu0 0.0
    %374 = vmatprep.subr.mxu0 0.0
    %375 = vmatpush1.xpose.msra.mxu0 0.0
    %376 = vmatprep.subr.mxu0 0.0
    %377 = vmatpush1.xpose.msra.mxu0 0.0
    %378 = vmatprep.subr.mxu0 0.0
    %379 = vmatpush1.xpose.msra.mxu0 0.0
    %380 = vmatprep.subr.mxu0 0.0
    %381 = vmatpush1.xpose.msra.mxu0 0.0
    %382 = vmatprep.mubr.f32.mxu0 0.0
    %383 = vmatmul.mubr.f32.gmra.mrb[0].mxu0 %v314
    %v384 = vpop.f32.mrb[0].mxu0
    %v385 = vadd.f32 0.0, %v384
    %v386 = vpop.f32.mrb[0].mxu0
    %387 = vdwg.mxu0
    %v388 = vmul.f32 %v385, 0.35355338
    %v389 = vadd.f32 %v388, %v139
    %v390 = vsel %vm143, %v389, -inf
    %391 = vmax.xlane.f32.xlu0 %v390
    %v392 = vpop.xlane.xlu0 %391
    %v393 = vsub.f32 %v389, %v392
    %v394 = vmul.f32 %v393, 1.442695
    %v395 = vpow.pop %v394
    %v396 = vsel %vm143, %v395, 0.0
    %397 = vadd.xlane.f32.xlu0 %v396
    %v398 = vpop.xlane.xlu0 %397
    %v399 = vrcp.pop %v398
    %v400 = vmul.f32 %v398, %v399
    %v401 = vsub.f32 2.0, %v400
    %v402 = vmul.f32 %v399, %v401
    %v403 = vmul.f32 %v395, %v402
    %404 = vrot.lane.b32.xlu0 %v135, 56
    %v405 = vpop.permute.xlu0 %404
    %v408 = vsel %vm143, %v403, 0
    %410 = vmatprep.subr.mxu0 0.0
    %411 = vmatpush1.msra.mxu0 %v405
    %412 = vmatprep.subr.mxu0 0.0
    %413 = vmatpush1.msra.mxu0 0.0
    %414 = vmatprep.subr.mxu0 0.0
    %415 = vmatpush1.msra.mxu0 0.0
    %416 = vmatprep.subr.mxu0 0.0
    %417 = vmatpush1.msra.mxu0 0.0
    %418 = vmatprep.subr.mxu0 0.0
    %419 = vmatpush1.msra.mxu0 0.0
    %420 = vmatprep.subr.mxu0 0.0
    %421 = vmatpush1.msra.mxu0 0.0
    %422 = vmatprep.subr.mxu0 0.0
    %423 = vmatpush1.msra.mxu0 0.0
    %424 = vmatprep.subr.mxu0 0.0
    %425 = vmatpush1.msra.mxu0 0.0
    %426 = vmatprep.subr.mxu0 0.0
    %427 = vmatpush1.msra.mxu0 0.0
    %428 = vmatprep.subr.mxu0 0.0
    %429 = vmatpush1.msra.mxu0 0.0
    %430 = vmatprep.subr.mxu0 0.0
    %431 = vmatpush1.msra.mxu0 0.0
    %432 = vmatprep.subr.mxu0 0.0
    %433 = vmatpush1.msra.mxu0 0.0
    %434 = vmatprep.subr.mxu0 0.0
    %435 = vmatpush1.msra.mxu0 0.0
    %436 = vmatprep.subr.mxu0 0.0
    %437 = vmatpush1.msra.mxu0 0.0
    %438 = vmatprep.subr.mxu0 0.0
    %439 = vmatpush1.msra.mxu0 0.0
    %440 = vmatprep.subr.mxu0 0.0
    %441 = vmatpush1.msra.mxu0 0.0
    %442 = vmatprep.subr.mxu0 0.0
    %443 = vmatpush1.msra.mxu0 0.0
    %444 = vmatprep.subr.mxu0 0.0
    %445 = vmatpush1.msra.mxu0 0.0
    %446 = vmatprep.subr.mxu0 0.0
    %447 = vmatpush1.msra.mxu0 0.0
    %448 = vmatprep.subr.mxu0 0.0
    %449 = vmatpush1.msra.mxu0 0.0
    %450 = vmatprep.subr.mxu0 0.0
    %451 = vmatpush1.msra.mxu0 0.0
    %452 = vmatprep.subr.mxu0 0.0
    %453 = vmatpush1.msra.mxu0 0.0
    %454 = vmatprep.subr.mxu0 0.0
    %455 = vmatpush1.msra.mxu0 0.0
    %456 = vmatprep.subr.mxu0 0.0
    %457 = vmatpush1.msra.mxu0 0.0
    %458 = vmatprep.subr.mxu0 0.0
    %459 = vmatpush1.msra.mxu0 0.0
    %460 = vmatprep.subr.mxu0 0.0
    %461 = vmatpush1.msra.mxu0 0.0
    %462 = vmatprep.subr.mxu0 0.0
    %463 = vmatpush1.msra.mxu0 0.0
    %464 = vmatprep.subr.mxu0 0.0
    %465 = vmatpush1.msra.mxu0 0.0
    %466 = vmatprep.subr.mxu0 0.0
    %467 = vmatpush1.msra.mxu0 0.0
    %468 = vmatprep.subr.mxu0 0.0
    %469 = vmatpush1.msra.mxu0 0.0
    %470 = vmatprep.subr.mxu0 0.0
    %471 = vmatpush1.msra.mxu0 0.0
    %472 = vmatprep.subr.mxu0 0.0
    %473 = vmatpush1.msra.mxu0 0.0
    %474 = vmatprep.mubr.f32.mxu0 0.0
    %475 = vmatmul.mubr.f32.gmra.mrb[0].mxu0 %v408
    %v476 = vpop.f32.mrb[0].mxu0
    %v477 = vadd.f32 0.0, %v476
    %v478 = vpop.f32.mrb[0].mxu0
    %479 = vdwg.mxu0
    %480 = vrot.lane.b32.xlu0 %v135, 112
    %v481 = vpop.permute.xlu0 %480
    %482 = vrot.lane.b32.xlu0 %v135, 80
    %v483 = vpop.permute.xlu0 %482
    %v484 = vsel %vm143, %v481, 0
    %v486 = vsel %vm143, %v483, 0
    %488 = vmatprep.subr.mxu0 0.0
    %489 = vmatpush1.xpose.msra.mxu0 %v486
    %490 = vmatprep.subr.mxu0 0.0
    %491 = vmatpush1.xpose.msra.mxu0 0.0
    %492 = vmatprep.subr.mxu0 0.0
    %493 = vmatpush1.xpose.msra.mxu0 0.0
    %494 = vmatprep.subr.mxu0 0.0
    %495 = vmatpush1.xpose.msra.mxu0 0.0
    %496 = vmatprep.subr.mxu0 0.0
    %497 = vmatpush1.xpose.msra.mxu0 0.0
    %498 = vmatprep.subr.mxu0 0.0
    %499 = vmatpush1.xpose.msra.mxu0 0.0
    %500 = vmatprep.subr.mxu0 0.0
    %501 = vmatpush1.xpose.msra.mxu0 0.0
    %502 = vmatprep.subr.mxu0 0.0
    %503 = vmatpush1.xpose.msra.mxu0 0.0
    %504 = vmatprep.subr.mxu0 0.0
    %505 = vmatpush1.xpose.msra.mxu0 0.0
    %506 = vmatprep.subr.mxu0 0.0
    %507 = vmatpush1.xpose.msra.mxu0 0.0
    %508 = vmatprep.subr.mxu0 0.0
    %509 = vmatpush1.xpose.msra.mxu0 0.0
    %510 = vmatprep.subr.mxu0 0.0
    %511 = vmatpush1.xpose.msra.mxu0 0.0
    %512 = vmatprep.subr.mxu0 0.0
    %513 = vmatpush1.xpose.msra.mxu0 0.0
    %514 = vmatprep.subr.mxu0 0.0
    %515 = vmatpush1.xpose.msra.mxu0 0.0
    %516 = vmatprep.subr.mxu0 0.0
    %517 = vmatpush1.xpose.msra.mxu0 0.0
    %518 = vmatprep.subr.mxu0 0.0
    %519 = vmatpush1.xpose.msra.mxu0 0.0
    %520 = vmatprep.subr.mxu0 0.0
    %521 = vmatpush1.xpose.msra.mxu0 0.0
    %522 = vmatprep.subr.mxu0 0.0
    %523 = vmatpush1.xpose.msra.mxu0 0.0
    %524 = vmatprep.subr.mxu0 0.0
    %525 = vmatpush1.xpose.msra.mxu0 0.0
    %526 = vmatprep.subr.mxu0 0.0
    %527 = vmatpush1.xpose.msra.mxu0 0.0
    %528 = vmatprep.subr.mxu0 0.0
    %529 = vmatpush1.xpose.msra.mxu0 0.0
    %530 = vmatprep.subr.mxu0 0.0
    %531 = vmatpush1.xpose.msra.mxu0 0.0
    %532 = vmatprep.subr.mxu0 0.0
    %533 = vmatpush1.xpose.msra.mxu0 0.0
    %534 = vmatprep.subr.mxu0 0.0
    %535 = vmatpush1.xpose.msra.mxu0 0.0
    %536 = vmatprep.subr.mxu0 0.0
    %537 = vmatpush1.xpose.msra.mxu0 0.0
    %538 = vmatprep.subr.mxu0 0.0
    %539 = vmatpush1.xpose.msra.mxu0 0.0
    %540 = vmatprep.subr.mxu0 0.0
    %541 = vmatpush1.xpose.msra.mxu0 0.0
    %542 = vmatprep.subr.mxu0 0.0
    %543 = vmatpush1.xpose.msra.mxu0 0.0
    %544 = vmatprep.subr.mxu0 0.0
    %545 = vmatpush1.xpose.msra.mxu0 0.0
    %546 = vmatprep.subr.mxu0 0.0
    %547 = vmatpush1.xpose.msra.mxu0 0.0
    %548 = vmatprep.subr.mxu0 0.0
    %549 = vmatpush1.xpose.msra.mxu0 0.0
    %550 = vmatprep.subr.mxu0 0.0
    %551 = vmatpush1.xpose.msra.mxu0 0.0
    %552 = vmatprep.mubr.f32.mxu0 0.0
    %553 = vmatmul.mubr.f32.gmra.mrb[0].mxu0 %v484
    %v554 = vpop.f32.mrb[0].mxu0
    %v555 = vadd.f32 0.0, %v554
    %v556 = vpop.f32.mrb[0].mxu0
    %557 = vdwg.mxu0
    %v558 = vmul.f32 %v555, 0.35355338
    %v559 = vadd.f32 %v558, %v139
    %v560 = vsel %vm143, %v559, -inf
    %561 = vmax.xlane.f32.xlu0 %v560
    %v562 = vpop.xlane.xlu0 %561
    %v563 = vsub.f32 %v559, %v562
    %v564 = vmul.f32 %v563, 1.442695
    %v565 = vpow.pop %v564
    %v566 = vsel %vm143, %v565, 0.0
    %567 = vadd.xlane.f32.xlu0 %v566
    %v568 = vpop.xlane.xlu0 %567
    %v569 = vrcp.pop %v568
    %v570 = vmul.f32 %v568, %v569
    %v571 = vsub.f32 2.0, %v570
    %v572 = vmul.f32 %v569, %v571
    %v573 = vmul.f32 %v565, %v572
    %574 = vrot.lane.b32.xlu0 %v135, 48
    %v575 = vpop.permute.xlu0 %574
    %v578 = vsel %vm143, %v573, 0
    %580 = vmatprep.subr.mxu0 0.0
    %581 = vmatpush1.msra.mxu0 %v575
    %582 = vmatprep.subr.mxu0 0.0
    %583 = vmatpush1.msra.mxu0 0.0
    %584 = vmatprep.subr.mxu0 0.0
    %585 = vmatpush1.msra.mxu0 0.0
    %586 = vmatprep.subr.mxu0 0.0
    %587 = vmatpush1.msra.mxu0 0.0
    %588 = vmatprep.subr.mxu0 0.0
    %589 = vmatpush1.msra.mxu0 0.0
    %590 = vmatprep.subr.mxu0 0.0
    %591 = vmatpush1.msra.mxu0 0.0
    %592 = vmatprep.subr.mxu0 0.0
    %593 = vmatpush1.msra.mxu0 0.0
    %594 = vmatprep.subr.mxu0 0.0
    %595 = vmatpush1.msra.mxu0 0.0
    %596 = vmatprep.subr.mxu0 0.0
    %597 = vmatpush1.msra.mxu0 0.0
    %598 = vmatprep.subr.mxu0 0.0
    %599 = vmatpush1.msra.mxu0 0.0
    %600 = vmatprep.subr.mxu0 0.0
    %601 = vmatpush1.msra.mxu0 0.0
    %602 = vmatprep.subr.mxu0 0.0
    %603 = vmatpush1.msra.mxu0 0.0
    %604 = vmatprep.subr.mxu0 0.0
    %605 = vmatpush1.msra.mxu0 0.0
    %606 = vmatprep.subr.mxu0 0.0
    %607 = vmatpush1.msra.mxu0 0.0
    %608 = vmatprep.subr.mxu0 0.0
    %609 = vmatpush1.msra.mxu0 0.0
    %610 = vmatprep.subr.mxu0 0.0
    %611 = vmatpush1.msra.mxu0 0.0
    %612 = vmatprep.subr.mxu0 0.0
    %613 = vmatpush1.msra.mxu0 0.0
    %614 = vmatprep.subr.mxu0 0.0
    %615 = vmatpush1.msra.mxu0 0.0
    %616 = vmatprep.subr.mxu0 0.0
    %617 = vmatpush1.msra.mxu0 0.0
    %618 = vmatprep.subr.mxu0 0.0
    %619 = vmatpush1.msra.mxu0 0.0
    %620 = vmatprep.subr.mxu0 0.0
    %621 = vmatpush1.msra.mxu0 0.0
    %622 = vmatprep.subr.mxu0 0.0
    %623 = vmatpush1.msra.mxu0 0.0
    %624 = vmatprep.subr.mxu0 0.0
    %625 = vmatpush1.msra.mxu0 0.0
    %626 = vmatprep.subr.mxu0 0.0
    %627 = vmatpush1.msra.mxu0 0.0
    %628 = vmatprep.subr.mxu0 0.0
    %629 = vmatpush1.msra.mxu0 0.0
    %630 = vmatprep.subr.mxu0 0.0
    %631 = vmatpush1.msra.mxu0 0.0
    %632 = vmatprep.subr.mxu0 0.0
    %633 = vmatpush1.msra.mxu0 0.0
    %634 = vmatprep.subr.mxu0 0.0
    %635 = vmatpush1.msra.mxu0 0.0
    %636 = vmatprep.subr.mxu0 0.0
    %637 = vmatpush1.msra.mxu0 0.0
    %638 = vmatprep.subr.mxu0 0.0
    %639 = vmatpush1.msra.mxu0 0.0
    %640 = vmatprep.subr.mxu0 0.0
    %641 = vmatpush1.msra.mxu0 0.0
    %642 = vmatprep.subr.mxu0 0.0
    %643 = vmatpush1.msra.mxu0 0.0
    %644 = vmatprep.mubr.f32.mxu0 0.0
    %645 = vmatmul.mubr.f32.gmra.mrb[0].mxu0 %v578
    %v646 = vpop.f32.mrb[0].mxu0
    %v647 = vadd.f32 0.0, %v646
    %v648 = vpop.f32.mrb[0].mxu0
    %649 = vdwg.mxu0
    %650 = vrot.lane.b32.xlu0 %v135, 104
    %v651 = vpop.permute.xlu0 %650
    %652 = vrot.lane.b32.xlu0 %v135, 72
    %v653 = vpop.permute.xlu0 %652
    %v654 = vsel %vm143, %v651, 0
    %v656 = vsel %vm143, %v653, 0
    %658 = vmatprep.subr.mxu0 0.0
    %659 = vmatpush1.xpose.msra.mxu0 %v656
    %660 = vmatprep.subr.mxu0 0.0
    %661 = vmatpush1.xpose.msra.mxu0 0.0
    %662 = vmatprep.subr.mxu0 0.0
    %663 = vmatpush1.xpose.msra.mxu0 0.0
    %664 = vmatprep.subr.mxu0 0.0
    %665 = vmatpush1.xpose.msra.mxu0 0.0
    %666 = vmatprep.subr.mxu0 0.0
    %667 = vmatpush1.xpose.msra.mxu0 0.0
    %668 = vmatprep.subr.mxu0 0.0
    %669 = vmatpush1.xpose.msra.mxu0 0.0
    %670 = vmatprep.subr.mxu0 0.0
    %671 = vmatpush1.xpose.msra.mxu0 0.0
    %672 = vmatprep.subr.mxu0 0.0
    %673 = vmatpush1.xpose.msra.mxu0 0.0
    %674 = vmatprep.subr.mxu0 0.0
    %675 = vmatpush1.xpose.msra.mxu0 0.0
    %676 = vmatprep.subr.mxu0 0.0
    %677 = vmatpush1.xpose.msra.mxu0 0.0
    %678 = vmatprep.subr.mxu0 0.0
    %679 = vmatpush1.xpose.msra.mxu0 0.0
    %680 = vmatprep.subr.mxu0 0.0
    %681 = vmatpush1.xpose.msra.mxu0 0.0
    %682 = vmatprep.subr.mxu0 0.0
    %683 = vmatpush1.xpose.msra.mxu0 0.0
    %684 = vmatprep.subr.mxu0 0.0
    %685 = vmatpush1.xpose.msra.mxu0 0.0
    %686 = vmatprep.subr.mxu0 0.0
    %687 = vmatpush1.xpose.msra.mxu0 0.0
    %688 = vmatprep.subr.mxu0 0.0
    %689 = vmatpush1.xpose.msra.mxu0 0.0
    %690 = vmatprep.subr.mxu0 0.0
    %691 = vmatpush1.xpose.msra.mxu0 0.0
    %692 = vmatprep.subr.mxu0 0.0
    %693 = vmatpush1.xpose.msra.mxu0 0.0
    %694 = vmatprep.subr.mxu0 0.0
    %695 = vmatpush1.xpose.msra.mxu0 0.0
    %696 = vmatprep.subr.mxu0 0.0
    %697 = vmatpush1.xpose.msra.mxu0 0.0
    %698 = vmatprep.subr.mxu0 0.0
    %699 = vmatpush1.xpose.msra.mxu0 0.0
    %700 = vmatprep.subr.mxu0 0.0
    %701 = vmatpush1.xpose.msra.mxu0 0.0
    %702 = vmatprep.subr.mxu0 0.0
    %703 = vmatpush1.xpose.msra.mxu0 0.0
    %704 = vmatprep.subr.mxu0 0.0
    %705 = vmatpush1.xpose.msra.mxu0 0.0
    %706 = vmatprep.subr.mxu0 0.0
    %707 = vmatpush1.xpose.msra.mxu0 0.0
    %708 = vmatprep.subr.mxu0 0.0
    %709 = vmatpush1.xpose.msra.mxu0 0.0
    %710 = vmatprep.subr.mxu0 0.0
    %711 = vmatpush1.xpose.msra.mxu0 0.0
    %712 = vmatprep.subr.mxu0 0.0
    %713 = vmatpush1.xpose.msra.mxu0 0.0
    %714 = vmatprep.subr.mxu0 0.0
    %715 = vmatpush1.xpose.msra.mxu0 0.0
    %716 = vmatprep.subr.mxu0 0.0
    %717 = vmatpush1.xpose.msra.mxu0 0.0
    %718 = vmatprep.subr.mxu0 0.0
    %719 = vmatpush1.xpose.msra.mxu0 0.0
    %720 = vmatprep.subr.mxu0 0.0
    %721 = vmatpush1.xpose.msra.mxu0 0.0
    %722 = vmatprep.mubr.f32.mxu0 0.0
    %723 = vmatmul.mubr.f32.gmra.mrb[0].mxu0 %v654
    %v724 = vpop.f32.mrb[0].mxu0
    %v725 = vadd.f32 0.0, %v724
    %v726 = vpop.f32.mrb[0].mxu0
    %727 = vdwg.mxu0
    %v728 = vmul.f32 %v725, 0.35355338
    %v729 = vadd.f32 %v728, %v139
    %v730 = vsel %vm143, %v729, -inf
    %731 = vmax.xlane.f32.xlu0 %v730
    %v732 = vpop.xlane.xlu0 %731
    %v733 = vsub.f32 %v729, %v732
    %v734 = vmul.f32 %v733, 1.442695
    %v735 = vpow.pop %v734
    %v736 = vsel %vm143, %v735, 0.0
    %737 = vadd.xlane.f32.xlu0 %v736
    %v738 = vpop.xlane.xlu0 %737
    %v739 = vrcp.pop %v738
    %v740 = vmul.f32 %v738, %v739
    %v741 = vsub.f32 2.0, %v740
    %v742 = vmul.f32 %v739, %v741
    %v743 = vmul.f32 %v735, %v742
    %744 = vrot.lane.b32.xlu0 %v135, 40
    %v745 = vpop.permute.xlu0 %744
    %v748 = vsel %vm143, %v743, 0
    %750 = vmatprep.subr.mxu0 0.0
    %751 = vmatpush1.msra.mxu0 %v745
    %752 = vmatprep.subr.mxu0 0.0
    %753 = vmatpush1.msra.mxu0 0.0
    %754 = vmatprep.subr.mxu0 0.0
    %755 = vmatpush1.msra.mxu0 0.0
    %756 = vmatprep.subr.mxu0 0.0
    %757 = vmatpush1.msra.mxu0 0.0
    %758 = vmatprep.subr.mxu0 0.0
    %759 = vmatpush1.msra.mxu0 0.0
    %760 = vmatprep.subr.mxu0 0.0
    %761 = vmatpush1.msra.mxu0 0.0
    %762 = vmatprep.subr.mxu0 0.0
    %763 = vmatpush1.msra.mxu0 0.0
    %764 = vmatprep.subr.mxu0 0.0
    %765 = vmatpush1.msra.mxu0 0.0
    %766 = vmatprep.subr.mxu0 0.0
    %767 = vmatpush1.msra.mxu0 0.0
    %768 = vmatprep.subr.mxu0 0.0
    %769 = vmatpush1.msra.mxu0 0.0
    %770 = vmatprep.subr.mxu0 0.0
    %771 = vmatpush1.msra.mxu0 0.0
    %772 = vmatprep.subr.mxu0 0.0
    %773 = vmatpush1.msra.mxu0 0.0
    %774 = vmatprep.subr.mxu0 0.0
    %775 = vmatpush1.msra.mxu0 0.0
    %776 = vmatprep.subr.mxu0 0.0
    %777 = vmatpush1.msra.mxu0 0.0
    %778 = vmatprep.subr.mxu0 0.0
    %779 = vmatpush1.msra.mxu0 0.0
    %780 = vmatprep.subr.mxu0 0.0
    %781 = vmatpush1.msra.mxu0 0.0
    %782 = vmatprep.subr.mxu0 0.0
    %783 = vmatpush1.msra.mxu0 0.0
    %784 = vmatprep.subr.mxu0 0.0
    %785 = vmatpush1.msra.mxu0 0.0
    %786 = vmatprep.subr.mxu0 0.0
    %787 = vmatpush1.msra.mxu0 0.0
    %788 = vmatprep.subr.mxu0 0.0
    %789 = vmatpush1.msra.mxu0 0.0
    %790 = vmatprep.subr.mxu0 0.0
    %791 = vmatpush1.msra.mxu0 0.0
    %792 = vmatprep.subr.mxu0 0.0
    %793 = vmatpush1.msra.mxu0 0.0
    %794 = vmatprep.subr.mxu0 0.0
    %795 = vmatpush1.msra.mxu0 0.0
    %796 = vmatprep.subr.mxu0 0.0
    %797 = vmatpush1.msra.mxu0 0.0
    %798 = vmatprep.subr.mxu0 0.0
    %799 = vmatpush1.msra.mxu0 0.0
    %800 = vmatprep.subr.mxu0 0.0
    %801 = vmatpush1.msra.mxu0 0.0
    %802 = vmatprep.subr.mxu0 0.0
    %803 = vmatpush1.msra.mxu0 0.0
    %804 = vmatprep.subr.mxu0 0.0
    %805 = vmatpush1.msra.mxu0 0.0
    %806 = vmatprep.subr.mxu0 0.0
    %807 = vmatpush1.msra.mxu0 0.0
    %808 = vmatprep.subr.mxu0 0.0
    %809 = vmatpush1.msra.mxu0 0.0
    %810 = vmatprep.subr.mxu0 0.0
    %811 = vmatpush1.msra.mxu0 0.0
    %812 = vmatprep.subr.mxu0 0.0
    %813 = vmatpush1.msra.mxu0 0.0
    %814 = vmatprep.mubr.f32.mxu0 0.0
    %815 = vmatmul.mubr.f32.gmra.mrb[0].mxu0 %v748
    %v816 = vpop.f32.mrb[0].mxu0
    %v817 = vadd.f32 0.0, %v816
    %v818 = vpop.f32.mrb[0].mxu0
    %819 = vdwg.mxu0
    %821 = vrot.lane.b32.xlu0 %v477, 8
    %v822 = vpop.permute.xlu0 %821
    %825 = vrot.lane.b32.xlu0 %v647, 16
    %v826 = vpop.permute.xlu0 %825
    %829 = vrot.lane.b32.xlu0 %v817, 24
    %v830 = vpop.permute.xlu0 %829
    %v832 = vsel %vm143, %v307, %v822
    %vm833 = vcmask 130048
    %v834 = vsel %vm833, %v832, %v826
    %vm835 = vcmask 195584
    %v836 = vsel %vm835, %v834, %v830
    %v837 = vadd.f32 %v836, %v138
    %vm838 = vcmask 261120
    %839 = vst.msk [vmem:[#allocation8] sm:$0xff] %vm838, %v837
    // Predicated region
    $region26: #{tpu_custom_call.1} parent=1 // pred_check
      _
    $region27: #{tpu_custom_call.1} parent=1 // pred_check_branch
      %841 = sbr.rel (0) target = $region29
    $region28: #{tpu_custom_call.1} parent=1 // pred_region
      %s843 = ssub.s32 128, 128
      %844 = vsyncadd [#allocation4], %s843
      %s846 = sshll.u32 [#allocation8], 4
      %s847 = int_to_ptr.vmem [resolvable:$true] %s846
      %849 = dma.vmem_to_hbm [thread:$0]  %s847, 128, %s3, [#allocation4]
    $region29: #{tpu_custom_call.1} parent=1 // pred_fallthru
      _
    // Predicated region
    $region30: #{tpu_custom_call.1} parent=1 // pred_check
      _
    $region31: #{tpu_custom_call.1} parent=1 // pred_check_branch
      %851 = sbr.rel (0) target = $region33
    $region32: #{tpu_custom_call.1} parent=1 // pred_region
      %852 = dma.done [#allocation4], 128
    $region33: #{tpu_custom_call.1} parent=1 // pred_fallthru
      _
    %853 = vsyncpa [#allocation3], 1
    %854 = vsyncpa [#allocation6], 1
    %855 = vsyncpa [#allocation4], 1

</llo_original>
